<compile_context>
chip_gen: v7x
topology: tpu7x:2x2x1
jax: 0.10.0
libtpu: 0.0.40
codegen_flags: <defaults>
</compile_context>

<pallas_src>
import math

import jax
import jax.numpy as jnp
from jax import lax
from jax.experimental import pallas as pl
from jax.experimental.pallas import tpu as pltpu


# freq='h': x_mark columns are [month, day, weekday, hour]; FixedEmbedding table sizes.
_FREQ_H_SIZES = (13, 32, 7, 24)


def _sincos_table(n, d_model):
    """Sin/cos table shared by PositionalEmbedding and FixedEmbedding."""
    pos = jnp.arange(n, dtype=jnp.float32)[:, None]
    div = jnp.exp(jnp.arange(0, d_model, 2, dtype=jnp.float32)
                  * (-math.log(10000.0) / d_model))
    tab = jnp.zeros((n, d_model), jnp.float32)
    tab = tab.at[:, 0::2].set(jnp.sin(pos * div))
    tab = tab.at[:, 1::2].set(jnp.cos(pos * div))
    return tab


def _block_diag(w, p):
    """(K, N) -> (p*K, p*N) block-diagonal replication (built once at setup)."""
    k, n = w.shape
    out = jnp.zeros((p * k, p * n), w.dtype)
    for i in range(p):
        out = out.at[i * k:(i + 1) * k, i * n:(i + 1) * n].set(w)
    return out


def pack_data_embedding_params(conv_weight, conv_bias, d_model, max_len=1000,
                               compute_dtype=jnp.bfloat16):
    """One-time parameter packing (no per-call transposes / casts in the hot path).

    compute_dtype: dtype of the MXU operands (conv weight, temporal table, x3).
      bf16 is MXU-native on v5e/v6e/v7x and halves x3 DMA traffic; accumulation is
      always f32.  Use jnp.float32 for bit-accurate parity with the PyTorch module.
    """
    dm, c_in, ks = conv_weight.shape
    assert dm == d_model and ks == 3 and d_model % 2 == 0
    # lane-pack factor: P consecutive positions per output row -> 128-lane-dense stores.
    # Falls back to P=1 (still correct, just masked vst) when d_model does not divide 128.
    P = 128 // d_model if (d_model < 128 and 128 % d_model == 0) else 1

    # circular conv (k=3) as matmul: input rows ordered [x_{l-1}; x_l; x_{l+1}]
    w_mm = jnp.concatenate([conv_weight[:, :, k].T for k in range(3)], axis=0)
    w_bd = _block_diag(w_mm, P).astype(compute_dtype)        # (P*3*c_in, P*d_model)

    # combined fixed sin/cos temporal table: rows = [month | day | weekday | hour]
    table = jnp.concatenate([_sincos_table(n, d_model) for n in _FREQ_H_SIZES], axis=0)
    T = table.shape[0]                                        # 76 for freq='h'
    # slab p holds the table in output-column block p (zeros elsewhere) so the kernel uses
    # a narrow (rows, T) 4-hot per packed position instead of a (rows, P*T) one.
    tab_stack = jnp.zeros((P, T, P * d_model), jnp.float32)
    for p in range(P):
        tab_stack = tab_stack.at[p, :, p * d_model:(p + 1) * d_model].set(table)
    tab_stack = tab_stack.astype(compute_dtype)

    col_off, acc = [], 0
    for n in _FREQ_H_SIZES:
        col_off.append(acc)
        acc += n

    # conv bias folded into the positional table (one fewer kernel operand / VPU add).
    pe_bias = _sincos_table(max_len, d_model) + conv_bias.astype(jnp.float32)[None, :]

    return dict(
        d_model=d_model, c_in=c_in, P=P, T=T, max_len=max_len,
        compute_dtype=jnp.dtype(compute_dtype),
        w_bd=w_bd, tab_stack=tab_stack, pe_bias=pe_bias,
        col_off=jnp.asarray(col_off, jnp.int32),
    )


def _embed_kernel_temporal(x3_ref, mark_ref, pe_ref, w_ref, tab_ref, o_ref):
    # x3_ref:   (TB, TL, P*3*c_in)  neighbour-concat packed inputs (circular conv as matmul)
    # mark_ref: (TB, TL, 4*P) int32 temporal indices (+ per-feature column offset)
    # pe_ref:   (TL, DM) f32        packed positional embedding with conv bias folded in
    # w_ref:    (P*3*c_in, DM)      block-diag conv weight       (grid-invariant)
    # tab_ref:  (P, T, DM)          per-pack sin/cos table slabs (grid-invariant)
    TB, TL, _ = x3_ref.shape
    P, T, DM = tab_ref.shape
    mh_dtype = tab_ref.dtype
    iota = lax.broadcasted_iota(jnp.int32, (TL, T), 1)        # hoisted: built once per step
    for b in range(TB):                                       # static unroll (TB <= 8)
        acc = jnp.dot(x3_ref[b], w_ref[...], preferred_element_type=jnp.float32)
        idx = mark_ref[b]                                     # (TL, 4*P)
        for p in range(P):
            # gather-as-matmul: 4-hot over the narrow T-wide table for packed position p
            mh = (iota == idx[:, 4 * p:4 * p + 1]).astype(mh_dtype)
            for f in range(1, 4):
                mh = mh + (iota == idx[:, 4 * p + f:4 * p + f + 1]).astype(mh_dtype)
            acc = acc + jnp.dot(mh, tab_ref[p], preferred_element_type=jnp.float32)
        o_ref[b] = (acc + pe_ref[...]).astype(o_ref.dtype)


def _embed_kernel_plain(x3_ref, pe_ref, w_ref, o_ref):
    # x_mark=None variant: no temporal operands and no temporal compute at all.
    TB = x3_ref.shape[0]
    for b in range(TB):
        acc = jnp.dot(x3_ref[b], w_ref[...], preferred_element_type=jnp.float32)
        o_ref[b] = (acc + pe_ref[...]).astype(o_ref.dtype)


def _choose_tiles(RL, B, per_row_bytes, pe_row_bytes, resident_bytes, out_row_bytes,
                  budget_bytes=12 << 20, target_out_block=2 << 20, max_tb=8):
    """Pick (TL, TB): biggest seq tile / batch block whose double-buffered working set
    fits `budget_bytes` (safe under v7x's 64 MiB VMEM; v5e/v6e have more headroom)."""
    cands = sorted({c for c in range(8, RL + 1, 8) if RL % c == 0} | {RL}, reverse=True)

    def fits(tl, tb):
        return resident_bytes + tl * pe_row_bytes + tb * tl * per_row_bytes <= budget_bytes

    TL = next((c for c in cands if fits(c, 1)), cands[-1])
    TB = 1
    for d in sorted(d for d in range(2, min(B, max_tb) + 1) if B % d == 0):
        steps = (RL // TL) * (B // d)
        if not fits(TL, d) or d * TL * out_row_bytes > target_out_block:
            break
        if steps < 2 and (RL // TL) * B >= 2:
            break      # keep >= 2 grid steps so v7x's two TensorCores both get work
        TB = d
    est = resident_bytes + TL * pe_row_bytes + TB * TL * per_row_bytes
    return TL, TB, est


def data_embedding_forward(params, x, x_mark=None, *, out_dtype=None):
    """DataEmbedding.forward (eval): value + positional (+ temporal); dropout = identity."""
    B, L, c_in = x.shape
    d_model, P, T = params['d_model'], params['P'], params['T']
    cd = params['compute_dtype']
    assert c_in == params['c_in']
    assert L <= params['max_len'], "sequence length exceeds positional-embedding max_len"
    out_dtype = jnp.dtype(x.dtype if out_dtype is None else out_dtype)
    has_mark = x_mark is not None

    # circular-conv neighbour concat; the wrap-around uses the ORIGINAL length L.
    # TODO(synk): for c_in ~ d_model move this halo build in-kernel to skip the extra HBM pass.
    x3 = jnp.concatenate([jnp.roll(x, 1, axis=1), x, jnp.roll(x, -1, axis=1)], axis=-1)

    # pad L up to a multiple of the lane-pack factor; padded rows are sliced off afterwards.
    Lp = -(-L // P) * P
    pad = Lp - L
    if pad:
        x3 = jnp.pad(x3, ((0, 0), (0, pad), (0, 0)))
    RL = Lp // P
    DM = P * d_model                       # lane-dense output width (128 for d_model <= 128)
    kx = P * 3 * c_in
    x3p = x3.reshape(B, RL, kx).astype(cd)

    pe = params['pe_bias'][:L]
    if pad:
        pe = jnp.pad(pe, ((0, pad), (0, 0)))
    pe_p = pe.reshape(RL, DM)              # free row-major reshape

    if has_mark:
        # NOTE: the 4*P-wide int32 last dim pads to 128 lanes in VMEM; small absolute cost.
        mark = x_mark.astype(jnp.int32) + params['col_off'][None, None, :]
        if pad:
            mark = jnp.pad(mark, ((0, 0), (0, pad), (0, 0)))
        markp = mark.reshape(B, RL, 4 * P)

    # ---- byte-aware tiling + scoped-VMEM limit ------------------------------------------
    cb, ob = cd.itemsize, out_dtype.itemsize
    per_row = 2 * (kx * cb + DM * ob) + DM * 4          # x3/out blocks (x2 buf) + f32 acc
    if has_mark:
        per_row += 2 * 128 * 4 + 128 * (cb + 4)         # mark block (lane-padded) + mh/iota
    pe_row = 2 * DM * 4                                 # pe block (x2 buf)
    resident = 2 * kx * DM * cb                         # conv weight (x2 buf)
    if has_mark:
        resident += 2 * P * (-(-T // 8) * 8) * DM * cb  # table slabs (x2 buf, sublane-padded)
    TL, TB, est = _choose_tiles(RL, B, per_row, pe_row, resident, DM * ob)
    vmem_limit = int(min(48 << 20, max(32 << 20, 2 * est)))
    grid = (RL // TL, B // TB)                          # seq tiles OUTER -> pe stays hot

    flops = 2 * B * RL * DM * (kx + (P * T if has_mark else 0))
    bytes_accessed = B * RL * (kx * cb + DM * ob) + RL * DM * 4 + kx * DM * cb
    if has_mark:
        bytes_accessed += B * RL * 4 * P * 4 + P * T * DM * cb

    # NOTE: pl.Buffered(1) on the (near-)grid-invariant pe/w/table specs would halve their
    # VMEM footprint; we keep default double-buffering for portability and instead account
    # for 2 buffers per operand in the byte budget above.
    if has_mark:
        kernel = _embed_kernel_temporal
        operands = (x3p, markp, pe_p, params['w_bd'], params['tab_stack'])
        in_specs = [
            pl.BlockSpec((TB, TL, kx),    lambda li, bi: (bi, li, 0)),
            pl.BlockSpec((TB, TL, 4 * P), lambda li, bi: (bi, li, 0)),
            pl.BlockSpec((TL, DM),        lambda li, bi: (li, 0)),
            pl.BlockSpec((kx, DM),        lambda li, bi: (0, 0)),
            pl.BlockSpec((P, T, DM),      lambda li, bi: (0, 0, 0)),
        ]
    else:
        kernel = _embed_kernel_plain
        operands = (x3p, pe_p, params['w_bd'])
        in_specs = [
            pl.BlockSpec((TB, TL, kx), lambda li, bi: (bi, li, 0)),
            pl.BlockSpec((TL, DM),     lambda li, bi: (li, 0)),
            pl.BlockSpec((kx, DM),     lambda li, bi: (0, 0)),
        ]

    out = pl.pallas_call(
        kernel,
        out_shape=jax.ShapeDtypeStruct((B, RL, DM), out_dtype),
        grid_spec=pltpu.PrefetchScalarGridSpec(
            num_scalar_prefetch=0,
            grid=grid,
            in_specs=in_specs,
            out_specs=pl.BlockSpec((TB, TL, DM), lambda li, bi: (bi, li, 0)),
        ),
        compiler_params=pltpu.CompilerParams(
            dimension_semantics=("parallel", "parallel"),
            vmem_limit_bytes=vmem_limit),
        cost_estimate=pl.CostEstimate(
            flops=int(flops), transcendentals=0, bytes_accessed=int(bytes_accessed)),
    )(*operands)

    out = out.reshape(B, Lp, d_model)       # free row-major unpack
    return out[:, :L] if pad else out       # dropout = identity in eval


def _reference(x, x_mark, conv_weight, conv_bias, d_model, max_len=1000):
    """Pure-JAX reference of DataEmbedding.forward (embed_type='fixed', freq='h', eval)."""
    B, L, _ = x.shape
    w0, w1, w2 = conv_weight[:, :, 0], conv_weight[:, :, 1], conv_weight[:, :, 2]
    val = (jnp.roll(x, 1, axis=1) @ w0.T + x @ w1.T + jnp.roll(x, -1, axis=1) @ w2.T
           + conv_bias)                                    # TokenEmbedding (circular conv k=3)
    out = val + _sincos_table(max_len, d_model)[:L][None]  # PositionalEmbedding
    if x_mark is not None:                                 # TemporalEmbedding (fixed, 'h')
        tabs = [_sincos_table(n, d_model) for n in _FREQ_H_SIZES]
        xm = x_mark.astype(jnp.int32)
        out = out + (tabs[0][xm[:, :, 0]] + tabs[1][xm[:, :, 1]]
                     + tabs[2][xm[:, :, 2]] + tabs[3][xm[:, :, 3]])
    return out


if __name__ == "__main__":
    def make_case(seed, B, L, c_in, d_model):
        k1, k2, k3, k4 = jax.random.split(jax.random.PRNGKey(seed), 4)
        bound = 1.0 / math.sqrt(c_in * 3)
        w = jax.random.normal(k3, (d_model, c_in, 3), jnp.float32) * bound
        bias = jax.random.uniform(k4, (d_model,), jnp.float32, -bound, bound)
        x = jax.random.normal(k1, (B, L, c_in), jnp.float32)
        maxes = jnp.array(_FREQ_H_SIZES, jnp.int32)
        xm = (jax.random.randint(k2, (B, L, 4), 0, 10000) % maxes).astype(jnp.int32)
        return x, xm, w, bias

    # 1) small lane-packed case (d_model=32 -> P=4), temporal marks, f32 end-to-end
    x, xm, w, bc = make_case(0, B=2, L=8, c_in=4, d_model=32)
    p32 = pack_data_embedding_params(w, bc, 32, compute_dtype=jnp.float32)
    y = jax.block_until_ready(data_embedding_forward(p32, x, xm))
    y_ref = _reference(x, xm, w, bc, 32)
    assert y.shape == (2, 8, 32) and y.dtype == jnp.float32
    assert jnp.allclose(y, y_ref, atol=2e-3, rtol=2e-3), float(jnp.max(jnp.abs(y - y_ref)))

    # 2) x_mark=None -> temporal-free kernel variant (no mark/table operands, no multihot)
    y0 = jax.block_until_ready(data_embedding_forward(p32, x, None))
    y0_ref = _reference(x, None, w, bc, 32)
    assert jnp.allclose(y0, y0_ref, atol=2e-3, rtol=2e-3)

    # 3) bf16 MXU operands + bf16 output stores (default packing), f32 accumulation inside
    pbf = pack_data_embedding_params(w, bc, 32)            # compute_dtype=bf16 (default)
    ybf = jax.block_until_ready(data_embedding_forward(pbf, x, xm, out_dtype=jnp.bfloat16))
    assert ybf.dtype == jnp.bfloat16
    assert jnp.allclose(ybf.astype(jnp.float32), y_ref, atol=1e-1, rtol=5e-2)

    # 4) L not a multiple of the pack factor (padding path) + batch blocking (TB=2)
    x4, xm4, w4, b4 = make_case(1, B=4, L=126, c_in=4, d_model=32)
    p4 = pack_data_embedding_params(w4, b4, 32, compute_dtype=jnp.float32)
    y4 = jax.block_until_ready(data_embedding_forward(p4, x4, xm4))
    y4_ref = _reference(x4, xm4, w4, b4, 32)
    assert y4.shape == (4, 126, 32)
    assert jnp.allclose(y4, y4_ref, atol=2e-3, rtol=2e-3)

    # 5) d_model >= 128 (P=1, un-packed) path
    x5, xm5, w5, b5 = make_case(2, B=2, L=64, c_in=7, d_model=128)
    p5 = pack_data_embedding_params(w5, b5, 128, compute_dtype=jnp.float32)
    y5 = jax.block_until_ready(data_embedding_forward(p5, x5, xm5))
    y5_ref = _reference(x5, xm5, w5, b5, 128)
    assert jnp.allclose(y5, y5_ref, atol=2e-3, rtol=2e-3)

    print("KERNEL_OK")
</pallas_src>

<mosaic_0001>
module attributes {stable_mosaic.version = 11 : i64} {
  func.func @_embed_kernel_temporal(%arg0: i32, %arg1: i32, %arg2: memref<1x2x48xf32, #tpu.memory_space<vmem>>, %arg3: memref<1x2x16xi32, #tpu.memory_space<vmem>>, %arg4: memref<2x128xf32, #tpu.memory_space<vmem>>, %arg5: memref<48x128xf32, #tpu.memory_space<vmem>>, %arg6: memref<4x76x128xf32, #tpu.memory_space<vmem>>, %arg7: memref<1x2x128xf32, #tpu.memory_space<vmem>>) attributes {dimension_semantics = [#tpu.dimension_semantics<parallel>, #tpu.dimension_semantics<parallel>], iteration_bounds = array<i64: 1, 2>, scalar_prefetch = 0 : i64, scratch_operands = 0 : i64, tpu.core_type = #tpu.core_type<tc>, window_params = [{transform_indices = @transform_0, window_bounds = array<i64: 1, 2, 48>}, {transform_indices = @transform_1, window_bounds = array<i64: 1, 2, 16>}, {transform_indices = @transform_2, window_bounds = array<i64: 2, 128>}, {pipeline_mode = #tpu.pipeline_mode<synchronous>, transform_indices = @transform_3, window_bounds = array<i64: 48, 128>}, {pipeline_mode = #tpu.pipeline_mode<synchronous>, transform_indices = @transform_4, window_bounds = array<i64: 4, 76, 128>}, {transform_indices = @transform_5, window_bounds = array<i64: 1, 2, 128>}]} {
    %0 = tpu.iota {dimensions = array<i32: 1>} : vector<2x76xi32>
    %c0 = arith.constant 0 : index
    %c0_0 = arith.constant 0 : index
    %c0_1 = arith.constant 0 : index
    %1 = vector.load %arg2[%c0, %c0_0, %c0_1] : memref<1x2x48xf32, #tpu.memory_space<vmem>>, vector<1x2x48xf32>
    %2 = vector.shape_cast %1 : vector<1x2x48xf32> to vector<2x48xf32>
    %c0_2 = arith.constant 0 : index
    %c0_3 = arith.constant 0 : index
    %3 = vector.load %arg5[%c0_2, %c0_3] : memref<48x128xf32, #tpu.memory_space<vmem>>, vector<48x128xf32>
    %cst = arith.constant dense<0.000000e+00> : vector<2x128xf32>
    %4 = tpu.matmul %2, %3, %cst {dimension_numbers = #tpu.dot_dimension_numbers<[1], [0], [0], [1], [0, 0, 1, 1], [], []>} : vector<2x48xf32>, vector<48x128xf32>, vector<2x128xf32> -> vector<2x128xf32>
    %c0_4 = arith.constant 0 : index
    %c0_5 = arith.constant 0 : index
    %c0_6 = arith.constant 0 : index
    %5 = vector.load %arg3[%c0_4, %c0_5, %c0_6] : memref<1x2x16xi32, #tpu.memory_space<vmem>>, vector<1x2x16xi32>
    %6 = vector.shape_cast %5 : vector<1x2x16xi32> to vector<2x16xi32>
    %7 = vector.extract_strided_slice %6 {offsets = [0, 0], sizes = [2, 1], strides = [1, 1]} : vector<2x16xi32> to vector<2x1xi32>
    %8 = vector.broadcast %7 : vector<2x1xi32> to vector<2x76xi32>
    %9 = arith.cmpi eq, %0, %8 : vector<2x76xi32>
    %10 = arith.extui %9 : vector<2x76xi1> to vector<2x76xi32>
    %11 = arith.sitofp %10 : vector<2x76xi32> to vector<2x76xf32>
    %12 = vector.extract_strided_slice %6 {offsets = [0, 1], sizes = [2, 1], strides = [1, 1]} : vector<2x16xi32> to vector<2x1xi32>
    %13 = vector.broadcast %12 : vector<2x1xi32> to vector<2x76xi32>
    %14 = arith.cmpi eq, %0, %13 : vector<2x76xi32>
    %15 = arith.extui %14 : vector<2x76xi1> to vector<2x76xi32>
    %16 = arith.sitofp %15 : vector<2x76xi32> to vector<2x76xf32>
    %17 = arith.addf %11, %16 : vector<2x76xf32>
    %18 = vector.extract_strided_slice %6 {offsets = [0, 2], sizes = [2, 1], strides = [1, 1]} : vector<2x16xi32> to vector<2x1xi32>
    %19 = vector.broadcast %18 : vector<2x1xi32> to vector<2x76xi32>
    %20 = arith.cmpi eq, %0, %19 : vector<2x76xi32>
    %21 = arith.extui %20 : vector<2x76xi1> to vector<2x76xi32>
    %22 = arith.sitofp %21 : vector<2x76xi32> to vector<2x76xf32>
    %23 = arith.addf %17, %22 : vector<2x76xf32>
    %24 = vector.extract_strided_slice %6 {offsets = [0, 3], sizes = [2, 1], strides = [1, 1]} : vector<2x16xi32> to vector<2x1xi32>
    %25 = vector.broadcast %24 : vector<2x1xi32> to vector<2x76xi32>
    %26 = arith.cmpi eq, %0, %25 : vector<2x76xi32>
    %27 = arith.extui %26 : vector<2x76xi1> to vector<2x76xi32>
    %28 = arith.sitofp %27 : vector<2x76xi32> to vector<2x76xf32>
    %29 = arith.addf %23, %28 : vector<2x76xf32>
    %c0_7 = arith.constant 0 : index
    %c0_8 = arith.constant 0 : index
    %c0_9 = arith.constant 0 : index
    %30 = vector.load %arg6[%c0_7, %c0_8, %c0_9] : memref<4x76x128xf32, #tpu.memory_space<vmem>>, vector<1x76x128xf32>
    %31 = vector.shape_cast %30 : vector<1x76x128xf32> to vector<76x128xf32>
    %cst_10 = arith.constant dense<0.000000e+00> : vector<2x128xf32>
    %32 = tpu.matmul %29, %31, %cst_10 {dimension_numbers = #tpu.dot_dimension_numbers<[1], [0], [0], [1], [0, 0, 1, 1], [], []>} : vector<2x76xf32>, vector<76x128xf32>, vector<2x128xf32> -> vector<2x128xf32>
    %33 = arith.addf %4, %32 : vector<2x128xf32>
    %34 = vector.extract_strided_slice %6 {offsets = [0, 4], sizes = [2, 1], strides = [1, 1]} : vector<2x16xi32> to vector<2x1xi32>
    %35 = vector.broadcast %34 : vector<2x1xi32> to vector<2x76xi32>
    %36 = arith.cmpi eq, %0, %35 : vector<2x76xi32>
    %37 = arith.extui %36 : vector<2x76xi1> to vector<2x76xi32>
    %38 = arith.sitofp %37 : vector<2x76xi32> to vector<2x76xf32>
    %39 = vector.extract_strided_slice %6 {offsets = [0, 5], sizes = [2, 1], strides = [1, 1]} : vector<2x16xi32> to vector<2x1xi32>
    %40 = vector.broadcast %39 : vector<2x1xi32> to vector<2x76xi32>
    %41 = arith.cmpi eq, %0, %40 : vector<2x76xi32>
    %42 = arith.extui %41 : vector<2x76xi1> to vector<2x76xi32>
    %43 = arith.sitofp %42 : vector<2x76xi32> to vector<2x76xf32>
    %44 = arith.addf %38, %43 : vector<2x76xf32>
    %45 = vector.extract_strided_slice %6 {offsets = [0, 6], sizes = [2, 1], strides = [1, 1]} : vector<2x16xi32> to vector<2x1xi32>
    %46 = vector.broadcast %45 : vector<2x1xi32> to vector<2x76xi32>
    %47 = arith.cmpi eq, %0, %46 : vector<2x76xi32>
    %48 = arith.extui %47 : vector<2x76xi1> to vector<2x76xi32>
    %49 = arith.sitofp %48 : vector<2x76xi32> to vector<2x76xf32>
    %50 = arith.addf %44, %49 : vector<2x76xf32>
    %51 = vector.extract_strided_slice %6 {offsets = [0, 7], sizes = [2, 1], strides = [1, 1]} : vector<2x16xi32> to vector<2x1xi32>
    %52 = vector.broadcast %51 : vector<2x1xi32> to vector<2x76xi32>
    %53 = arith.cmpi eq, %0, %52 : vector<2x76xi32>
    %54 = arith.extui %53 : vector<2x76xi1> to vector<2x76xi32>
    %55 = arith.sitofp %54 : vector<2x76xi32> to vector<2x76xf32>
    %56 = arith.addf %50, %55 : vector<2x76xf32>
    %c1 = arith.constant 1 : index
    %c0_11 = arith.constant 0 : index
    %c0_12 = arith.constant 0 : index
    %57 = vector.load %arg6[%c1, %c0_11, %c0_12] : memref<4x76x128xf32, #tpu.memory_space<vmem>>, vector<1x76x128xf32>
    %58 = vector.shape_cast %57 : vector<1x76x128xf32> to vector<76x128xf32>
    %cst_13 = arith.constant dense<0.000000e+00> : vector<2x128xf32>
    %59 = tpu.matmul %56, %58, %cst_13 {dimension_numbers = #tpu.dot_dimension_numbers<[1], [0], [0], [1], [0, 0, 1, 1], [], []>} : vector<2x76xf32>, vector<76x128xf32>, vector<2x128xf32> -> vector<2x128xf32>
    %60 = arith.addf %33, %59 : vector<2x128xf32>
    %61 = vector.extract_strided_slice %6 {offsets = [0, 8], sizes = [2, 1], strides = [1, 1]} : vector<2x16xi32> to vector<2x1xi32>
    %62 = vector.broadcast %61 : vector<2x1xi32> to vector<2x76xi32>
    %63 = arith.cmpi eq, %0, %62 : vector<2x76xi32>
    %64 = arith.extui %63 : vector<2x76xi1> to vector<2x76xi32>
    %65 = arith.sitofp %64 : vector<2x76xi32> to vector<2x76xf32>
    %66 = vector.extract_strided_slice %6 {offsets = [0, 9], sizes = [2, 1], strides = [1, 1]} : vector<2x16xi32> to vector<2x1xi32>
    %67 = vector.broadcast %66 : vector<2x1xi32> to vector<2x76xi32>
    %68 = arith.cmpi eq, %0, %67 : vector<2x76xi32>
    %69 = arith.extui %68 : vector<2x76xi1> to vector<2x76xi32>
    %70 = arith.sitofp %69 : vector<2x76xi32> to vector<2x76xf32>
    %71 = arith.addf %65, %70 : vector<2x76xf32>
    %72 = vector.extract_strided_slice %6 {offsets = [0, 10], sizes = [2, 1], strides = [1, 1]} : vector<2x16xi32> to vector<2x1xi32>
    %73 = vector.broadcast %72 : vector<2x1xi32> to vector<2x76xi32>
    %74 = arith.cmpi eq, %0, %73 : vector<2x76xi32>
    %75 = arith.extui %74 : vector<2x76xi1> to vector<2x76xi32>
    %76 = arith.sitofp %75 : vector<2x76xi32> to vector<2x76xf32>
    %77 = arith.addf %71, %76 : vector<2x76xf32>
    %78 = vector.extract_strided_slice %6 {offsets = [0, 11], sizes = [2, 1], strides = [1, 1]} : vector<2x16xi32> to vector<2x1xi32>
    %79 = vector.broadcast %78 : vector<2x1xi32> to vector<2x76xi32>
    %80 = arith.cmpi eq, %0, %79 : vector<2x76xi32>
    %81 = arith.extui %80 : vector<2x76xi1> to vector<2x76xi32>
    %82 = arith.sitofp %81 : vector<2x76xi32> to vector<2x76xf32>
    %83 = arith.addf %77, %82 : vector<2x76xf32>
    %c2 = arith.constant 2 : index
    %c0_14 = arith.constant 0 : index
    %c0_15 = arith.constant 0 : index
    %84 = vector.load %arg6[%c2, %c0_14, %c0_15] : memref<4x76x128xf32, #tpu.memory_space<vmem>>, vector<1x76x128xf32>
    %85 = vector.shape_cast %84 : vector<1x76x128xf32> to vector<76x128xf32>
    %cst_16 = arith.constant dense<0.000000e+00> : vector<2x128xf32>
    %86 = tpu.matmul %83, %85, %cst_16 {dimension_numbers = #tpu.dot_dimension_numbers<[1], [0], [0], [1], [0, 0, 1, 1], [], []>} : vector<2x76xf32>, vector<76x128xf32>, vector<2x128xf32> -> vector<2x128xf32>
    %87 = arith.addf %60, %86 : vector<2x128xf32>
    %88 = vector.extract_strided_slice %6 {offsets = [0, 12], sizes = [2, 1], strides = [1, 1]} : vector<2x16xi32> to vector<2x1xi32>
    %89 = vector.broadcast %88 : vector<2x1xi32> to vector<2x76xi32>
    %90 = arith.cmpi eq, %0, %89 : vector<2x76xi32>
    %91 = arith.extui %90 : vector<2x76xi1> to vector<2x76xi32>
    %92 = arith.sitofp %91 : vector<2x76xi32> to vector<2x76xf32>
    %93 = vector.extract_strided_slice %6 {offsets = [0, 13], sizes = [2, 1], strides = [1, 1]} : vector<2x16xi32> to vector<2x1xi32>
    %94 = vector.broadcast %93 : vector<2x1xi32> to vector<2x76xi32>
    %95 = arith.cmpi eq, %0, %94 : vector<2x76xi32>
    %96 = arith.extui %95 : vector<2x76xi1> to vector<2x76xi32>
    %97 = arith.sitofp %96 : vector<2x76xi32> to vector<2x76xf32>
    %98 = arith.addf %92, %97 : vector<2x76xf32>
    %99 = vector.extract_strided_slice %6 {offsets = [0, 14], sizes = [2, 1], strides = [1, 1]} : vector<2x16xi32> to vector<2x1xi32>
    %100 = vector.broadcast %99 : vector<2x1xi32> to vector<2x76xi32>
    %101 = arith.cmpi eq, %0, %100 : vector<2x76xi32>
    %102 = arith.extui %101 : vector<2x76xi1> to vector<2x76xi32>
    %103 = arith.sitofp %102 : vector<2x76xi32> to vector<2x76xf32>
    %104 = arith.addf %98, %103 : vector<2x76xf32>
    %105 = vector.extract_strided_slice %6 {offsets = [0, 15], sizes = [2, 1], strides = [1, 1]} : vector<2x16xi32> to vector<2x1xi32>
    %106 = vector.broadcast %105 : vector<2x1xi32> to vector<2x76xi32>
    %107 = arith.cmpi eq, %0, %106 : vector<2x76xi32>
    %108 = arith.extui %107 : vector<2x76xi1> to vector<2x76xi32>
    %109 = arith.sitofp %108 : vector<2x76xi32> to vector<2x76xf32>
    %110 = arith.addf %104, %109 : vector<2x76xf32>
    %c3 = arith.constant 3 : index
    %c0_17 = arith.constant 0 : index
    %c0_18 = arith.constant 0 : index
    %111 = vector.load %arg6[%c3, %c0_17, %c0_18] : memref<4x76x128xf32, #tpu.memory_space<vmem>>, vector<1x76x128xf32>
    %112 = vector.shape_cast %111 : vector<1x76x128xf32> to vector<76x128xf32>
    %cst_19 = arith.constant dense<0.000000e+00> : vector<2x128xf32>
    %113 = tpu.matmul %110, %112, %cst_19 {dimension_numbers = #tpu.dot_dimension_numbers<[1], [0], [0], [1], [0, 0, 1, 1], [], []>} : vector<2x76xf32>, vector<76x128xf32>, vector<2x128xf32> -> vector<2x128xf32>
    %114 = arith.addf %87, %113 : vector<2x128xf32>
    %c0_20 = arith.constant 0 : index
    %c0_21 = arith.constant 0 : index
    %115 = vector.load %arg4[%c0_20, %c0_21] : memref<2x128xf32, #tpu.memory_space<vmem>>, vector<2x128xf32>
    %116 = arith.addf %114, %115 : vector<2x128xf32>
    %c0_22 = arith.constant 0 : index
    %c0_23 = arith.constant 0 : index
    %c0_24 = arith.constant 0 : index
    %117 = vector.load %arg7[%c0_22, %c0_23, %c0_24] : memref<1x2x128xf32, #tpu.memory_space<vmem>>, vector<1x2x128xf32>
    %118 = vector.shape_cast %117 : vector<1x2x128xf32> to vector<2x128xf32>
    %119 = vector.shape_cast %116 : vector<2x128xf32> to vector<1x2x128xf32>
    tpu.vector_store %arg7[%c0_22, %c0_23, %c0_24], %119 {strides = array<i32>} : memref<1x2x128xf32, #tpu.memory_space<vmem>>, vector<1x2x128xf32>,
    return
  }
  func.func @transform_0(%arg0: i32, %arg1: i32) -> (i32, i32, i32) {
    %c0_i32 = arith.constant 0 : i32
    %c0_i32_0 = arith.constant 0 : i32
    return %arg1, %arg0, %c0_i32 : i32, i32, i32
  }
  func.func @transform_1(%arg0: i32, %arg1: i32) -> (i32, i32, i32) {
    %c0_i32 = arith.constant 0 : i32
    %c0_i32_0 = arith.constant 0 : i32
    return %arg1, %arg0, %c0_i32 : i32, i32, i32
  }
  func.func @transform_2(%arg0: i32, %arg1: i32) -> (i32, i32) {
    %c0_i32 = arith.constant 0 : i32
    %c0_i32_0 = arith.constant 0 : i32
    return %arg0, %c0_i32 : i32, i32
  }
  func.func @transform_3(%arg0: i32, %arg1: i32) -> (i32, i32) {
    %c0_i32 = arith.constant 0 : i32
    %c0_i32_0 = arith.constant 0 : i32
    %c0_i32_1 = arith.constant 0 : i32
    return %c0_i32, %c0_i32_0 : i32, i32
  }
  func.func @transform_4(%arg0: i32, %arg1: i32) -> (i32, i32, i32) {
    %c0_i32 = arith.constant 0 : i32
    %c0_i32_0 = arith.constant 0 : i32
    %c0_i32_1 = arith.constant 0 : i32
    %c0_i32_2 = arith.constant 0 : i32
    return %c0_i32, %c0_i32_0, %c0_i32_1 : i32, i32, i32
  }
  func.func @transform_5(%arg0: i32, %arg1: i32) -> (i32, i32, i32) {
    %c0_i32 = arith.constant 0 : i32
    %c0_i32_0 = arith.constant 0 : i32
    return %arg1, %arg0, %c0_i32 : i32, i32, i32
  }
}

</mosaic_0001>

<llo_original>
// kernel: tpu_custom_call.1
$region0: #{tpu_custom_call.1}
  #allocation0 [shape = 'u32[]', space=smem, size = 0x4, offset = 0x4, fixed_abs, tag = 'smem constant byte address 0x4 - core index']
  #allocation1 [shape = 'u32[144,128]{1,0:T(1,128)}', space=vmem, size = 0x12000, scoped, tag = 'internal scratch']
  %s0 = inlined_call_operand.vmem [shape: f32[2,2,48], index: 0, kind: input, shape index: {}]
  %s1 = inlined_call_operand.vmem [shape: s32[2,2,16], index: 1, kind: input, shape index: {}]
  %s2 = inlined_call_operand.vmem [shape: f32[2,128], index: 2, kind: input, shape index: {}]
  %s3 = inlined_call_operand.vmem [shape: f32[48,128], index: 3, kind: input, shape index: {}]
  %s4 = inlined_call_operand.vmem [shape: f32[4,76,128], index: 4, kind: input, shape index: {}]
  %s5 = inlined_call_operand.hbm [shape: f32[2,2,128], index: 5, kind: output, shape index: {}]
  %s6 = sld [smem:[#allocation0]]
  $region53: #{tpu_custom_call.1} parent=0
    _
  %s8 = ssub.s32 1, %s6
  %s9 = scalar_select 0, %s8, %s6
  $region1: #{tpu_custom_call.1} parent=0
    #allocation2 [shape = 'u8[2048]{0}', space=vmem, size = 0x800, scoped, tag = 'output window, operand 0']
    #allocation3 [shape = 's32[2]{0}', space=sflag, size = 0x8, scoped, tag = 'scoped memory for tpu_custom_call.1']
    %10 = vsyncpa [#allocation3], 0
    %s11 = scalar_lea.sflag [#allocation3], 1
    %12 = vsyncpa %s11, 0
    loop: start=0, step=1, limit=4
    $region2: #{tpu_custom_call.1} parent=1 // loop_pre_header
      _
    $region3: #{tpu_custom_call.1} parent=1 // loop_header
      %s14 = sphi 0, %s18
      %p15 = scmp.ge.s32.totalorder %s14, 4
      %s21 = sphi 0, %s33
      %s22 = sphi 0, %s29
      %s23 = sphi 0, %s21
      %s24 = sphi 0, %s22
      %s25 = sphi 0, %s23
      %s26 = sphi 0, %s24
      %s38 = sphi 0, %s40
      %s41 = sphi 0, %s38
      %s42 = sphi 0, %s41
      %s58 = sphi 0, %s42
      %s66 = sphi 0, %s68
      %s69 = sphi 0, %s66
      %s70 = sphi 0, %s69
      %s86 = sphi 0, %s70
      %s92 = sphi 0, %s94
      %s95 = sphi 0, %s92
      %s96 = sphi 0, %s95
      %s112 = sphi 0, %s96
      %s116 = sphi 0, %s116
      %s118 = sphi 0, %s116
      %s119 = sphi 0, %s118
      %s133 = sphi 0, %s119
      %s137 = sphi 0, %s137
      %s139 = sphi 0, %s137
      %s140 = sphi 0, %s139
      %s154 = sphi 0, %s140
      %s162 = sphi 0, %s164
      %s165 = sphi 0, %s162
      %s166 = sphi 0, %s165
      %s182 = sphi 0, %s166
    $region4: #{tpu_custom_call.1} parent=1 // loop_header_branch
      %17 = sbr.rel (%p15) target = $region8
    $region5: #{tpu_custom_call.1} parent=1 // loop_body
      %s19 = ssub.s32 %s14, 1
      %s20 = ssub.s32 %s14, 2
      %s27 = sadd.s32 1, %s22
      %p28 = scmp.ge.s32.totalorder %s27, 2
      %s29 = scalar_select %p28, 0, %s27
      %s30 = sadd.s32 1, %s21
      %s31 = scalar_select %p28, %s30, %s21
      %p32 = scmp.ge.s32.totalorder %s31, 1
      %s33 = scalar_select %p32, 0, %s31
      %s34 = ssub.s32 %s22, %s29
      %s35 = ssub.s32 %s21, %s33
      %s36 = sor.u32 %s34, %s35
      %p37 = scmp.eq.s32.totalorder %s36, 0
      %s39 = sadd.s32 %s38, 1
      %s40 = scalar_select %p37, %s38, %s39
      %p43 = pneg %p37
      %p44 = scmp.eq.s32.totalorder %s14, 1
      %p45 = por %p43, %p44
      %p46 = scmp.ne.s32.totalorder %s38, %s41
      %p47 = scmp.eq.s32.totalorder %s14, 0
      %p48 = por %p46, %p47
      %p49 = scmp.ne.s32.totalorder %s38, %s41
      %p50 = scmp.eq.s32.totalorder %s19, 1
      %p51 = por %p49, %p50
      %p52 = scmp.ne.s32.totalorder %s41, %s42
      %p53 = scmp.eq.s32.totalorder %s19, 0
      %p54 = por %p52, %p53
      %p55 = scmp.ne.s32.totalorder %s41, %s42
      %p56 = scmp.eq.s32.totalorder %s20, 1
      %p57 = por %p55, %p56
      %p59 = scmp.ne.s32.totalorder %s42, %s58
      %p60 = scmp.eq.s32.totalorder %s20, 0
      %p61 = por %p59, %p60
      %s62 = ssub.s32 %s22, %s29
      %s63 = ssub.s32 %s21, %s33
      %s64 = sor.u32 %s62, %s63
      %p65 = scmp.eq.s32.totalorder %s64, 0
      %s67 = sadd.s32 %s66, 1
      %s68 = scalar_select %p65, %s66, %s67
      %p71 = pneg %p65
      %p72 = scmp.eq.s32.totalorder %s14, 1
      %p73 = por %p71, %p72
      %p74 = scmp.ne.s32.totalorder %s66, %s69
      %p75 = scmp.eq.s32.totalorder %s14, 0
      %p76 = por %p74, %p75
      %p77 = scmp.ne.s32.totalorder %s66, %s69
      %p78 = scmp.eq.s32.totalorder %s19, 1
      %p79 = por %p77, %p78
      %p80 = scmp.ne.s32.totalorder %s69, %s70
      %p81 = scmp.eq.s32.totalorder %s19, 0
      %p82 = por %p80, %p81
      %p83 = scmp.ne.s32.totalorder %s69, %s70
      %p84 = scmp.eq.s32.totalorder %s20, 1
      %p85 = por %p83, %p84
      %p87 = scmp.ne.s32.totalorder %s70, %s86
      %p88 = scmp.eq.s32.totalorder %s20, 0
      %p89 = por %p87, %p88
      %s90 = ssub.s32 %s21, %s33
      %p91 = scmp.eq.s32.totalorder %s90, 0
      %s93 = sadd.s32 %s92, 1
      %s94 = scalar_select %p91, %s92, %s93
      %p97 = pneg %p91
      %p98 = scmp.eq.s32.totalorder %s14, 1
      %p99 = por %p97, %p98
      %p100 = scmp.ne.s32.totalorder %s92, %s95
      %p101 = scmp.eq.s32.totalorder %s14, 0
      %p102 = por %p100, %p101
      %p103 = scmp.ne.s32.totalorder %s92, %s95
      %p104 = scmp.eq.s32.totalorder %s19, 1
      %p105 = por %p103, %p104
      %p106 = scmp.ne.s32.totalorder %s95, %s96
      %p107 = scmp.eq.s32.totalorder %s19, 0
      %p108 = por %p106, %p107
      %p109 = scmp.ne.s32.totalorder %s95, %s96
      %p110 = scmp.eq.s32.totalorder %s20, 1
      %p111 = por %p109, %p110
      %p113 = scmp.ne.s32.totalorder %s96, %s112
      %p114 = scmp.eq.s32.totalorder %s20, 0
      %p115 = por %p113, %p114
      %s117 = sadd.s32 %s116, 1
      %p120 = scmp.eq.s32.totalorder %s14, 1
      %p121 = scmp.ne.s32.totalorder %s116, %s118
      %p122 = scmp.eq.s32.totalorder %s14, 0
      %p123 = por %p121, %p122
      %p124 = scmp.ne.s32.totalorder %s116, %s118
      %p125 = scmp.eq.s32.totalorder %s19, 1
      %p126 = por %p124, %p125
      %p127 = scmp.ne.s32.totalorder %s118, %s119
      %p128 = scmp.eq.s32.totalorder %s19, 0
      %p129 = por %p127, %p128
      %p130 = scmp.ne.s32.totalorder %s118, %s119
      %p131 = scmp.eq.s32.totalorder %s20, 1
      %p132 = por %p130, %p131
      %p134 = scmp.ne.s32.totalorder %s119, %s133
      %p135 = scmp.eq.s32.totalorder %s20, 0
      %p136 = por %p134, %p135
      %s138 = sadd.s32 %s137, 1
      %p141 = scmp.eq.s32.totalorder %s14, 1
      %p142 = scmp.ne.s32.totalorder %s137, %s139
      %p143 = scmp.eq.s32.totalorder %s14, 0
      %p144 = por %p142, %p143
      %p145 = scmp.ne.s32.totalorder %s137, %s139
      %p146 = scmp.eq.s32.totalorder %s19, 1
      %p147 = por %p145, %p146
      %p148 = scmp.ne.s32.totalorder %s139, %s140
      %p149 = scmp.eq.s32.totalorder %s19, 0
      %p150 = por %p148, %p149
      %p151 = scmp.ne.s32.totalorder %s139, %s140
      %p152 = scmp.eq.s32.totalorder %s20, 1
      %p153 = por %p151, %p152
      %p155 = scmp.ne.s32.totalorder %s140, %s154
      %p156 = scmp.eq.s32.totalorder %s20, 0
      %p157 = por %p155, %p156
      %s158 = ssub.s32 %s22, %s29
      %s159 = ssub.s32 %s21, %s33
      %s160 = sor.u32 %s158, %s159
      %p161 = scmp.eq.s32.totalorder %s160, 0
      %s163 = sadd.s32 %s162, 1
      %s164 = scalar_select %p161, %s162, %s163
      %p167 = pneg %p161
      %p168 = scmp.eq.s32.totalorder %s14, 1
      %p169 = por %p167, %p168
      %p170 = scmp.ne.s32.totalorder %s162, %s165
      %p171 = scmp.eq.s32.totalorder %s14, 0
      %p172 = por %p170, %p171
      %p173 = scmp.ne.s32.totalorder %s162, %s165
      %p174 = scmp.eq.s32.totalorder %s19, 1
      %p175 = por %p173, %p174
      %p176 = scmp.ne.s32.totalorder %s165, %s166
      %p177 = scmp.eq.s32.totalorder %s19, 0
      %p178 = por %p176, %p177
      %p179 = scmp.ne.s32.totalorder %s165, %s166
      %p180 = scmp.eq.s32.totalorder %s20, 1
      %p181 = por %p179, %p180
      %p183 = scmp.ne.s32.totalorder %s166, %s182
      %p184 = scmp.eq.s32.totalorder %s20, 0
      %p185 = por %p183, %p184
      %p186 = scmp.le.s32.totalorder 1, %s14
      %p187 = scmp.lt.s32.totalorder %s14, 3
      %p188 = pnand %p186, %p187
      %p189 = pneg %p188
      // Predicated region
      $region9: #{tpu_custom_call.1} parent=5 // pred_check
        _
      $region10: #{tpu_custom_call.1} parent=5 // pred_check_branch
        %191 = sbr.rel (%p188) target = $region12
      $region11: #{tpu_custom_call.1} parent=5 // pred_region
        %s192 = ssub.s32 %s14, 1
        // Predicated region
        $region13: #{tpu_custom_call.1} parent=11 // pred_check
          %p193 = pneg %p108
        $region14: #{tpu_custom_call.1} parent=11 // pred_check_branch
          %195 = sbr.rel (%p193) target = $region16
        $region15: #{tpu_custom_call.1} parent=11 // pred_region
          %p196 = scmp.lt.s32.totalorder %s23, 0
          %s197 = scalar_select %p196, %s23, 0
          %s198 = smul.addr %s197, 2
          %s199 = scalar_lea.vmem %s2, %s198
        $region16: #{tpu_custom_call.1} parent=11 // pred_fallthru
          _
        // Predicated region
        $region17: #{tpu_custom_call.1} parent=11 // pred_check
          %p200 = pneg %p129
        $region18: #{tpu_custom_call.1} parent=11 // pred_check_branch
          %202 = sbr.rel (%p200) target = $region20
        $region19: #{tpu_custom_call.1} parent=11 // pred_region
          _
        $region20: #{tpu_custom_call.1} parent=11 // pred_fallthru
          _
        // Predicated region
        $region21: #{tpu_custom_call.1} parent=11 // pred_check
          %p203 = pneg %p150
        $region22: #{tpu_custom_call.1} parent=11 // pred_check_branch
          %205 = sbr.rel (%p203) target = $region24
        $region23: #{tpu_custom_call.1} parent=11 // pred_region
          _
        $region24: #{tpu_custom_call.1} parent=11 // pred_fallthru
          _
      $region12: #{tpu_custom_call.1} parent=5 // pred_fallthru
        _
      %p206 = scmp.lt.s32.totalorder %s14, 2
      // Predicated region
      $region25: #{tpu_custom_call.1} parent=5 // pred_check
        %p207 = pneg %p206
      $region26: #{tpu_custom_call.1} parent=5 // pred_check_branch
        %209 = sbr.rel (%p207) target = $region28
      $region27: #{tpu_custom_call.1} parent=5 // pred_region
        // Predicated region
        $region29: #{tpu_custom_call.1} parent=27 // pred_check
          %p210 = pneg %p48
        $region30: #{tpu_custom_call.1} parent=27 // pred_check_branch
          %212 = sbr.rel (%p210) target = $region32
        $region31: #{tpu_custom_call.1} parent=27 // pred_region
          %p213 = scmp.lt.s32.totalorder %s22, 1
          %s214 = scalar_select %p213, %s22, 1
          %p215 = scmp.lt.s32.totalorder %s21, 0
          %s216 = scalar_select %p215, %s21, 0
          %s217 = sadd.s32 %s216, %s214
          %s218 = smul.addr %s217, 2
          %s219 = scalar_lea.vmem %s0, %s218
        $region32: #{tpu_custom_call.1} parent=27 // pred_fallthru
          _
        // Predicated region
        $region33: #{tpu_custom_call.1} parent=27 // pred_check
          %p220 = pneg %p76
        $region34: #{tpu_custom_call.1} parent=27 // pred_check_branch
          %222 = sbr.rel (%p220) target = $region36
        $region35: #{tpu_custom_call.1} parent=27 // pred_region
          %p223 = scmp.lt.s32.totalorder %s22, 1
          %s224 = scalar_select %p223, %s22, 1
          %p225 = scmp.lt.s32.totalorder %s21, 0
          %s226 = scalar_select %p225, %s21, 0
          %s227 = sadd.s32 %s226, %s224
          %s228 = smul.addr %s227, 2
          %s229 = scalar_lea.vmem %s1, %s228
        $region36: #{tpu_custom_call.1} parent=27 // pred_fallthru
          _
      $region28: #{tpu_custom_call.1} parent=5 // pred_fallthru
        _
      %p230 = scmp.le.s32.totalorder 1, %s14
      %p231 = scmp.lt.s32.totalorder %s14, 3
      %p232 = pnand %p230, %p231
      %p233 = pneg %p232
      // Predicated region
      $region37: #{tpu_custom_call.1} parent=5 // pred_check
        _
      $region38: #{tpu_custom_call.1} parent=5 // pred_check_branch
        %235 = sbr.rel (%p232) target = $region40
      $region39: #{tpu_custom_call.1} parent=5 // pred_region
        %s236 = ssub.s32 %s14, 1
        %p237 = scmp.lt.s32.totalorder %s24, 1
        %s238 = scalar_select %p237, %s24, 1
        %p239 = scmp.lt.s32.totalorder %s23, 0
        %s240 = scalar_select %p239, %s23, 0
        %s241 = sadd.s32 %s240, %s238
        %s242 = smul.addr %s241, 2
        %s243 = scalar_lea.vmem %s0, %s242
        %p244 = pneg %p54
        %p245 = pneg %p51
        %p246 = scmp.lt.s32.totalorder %s24, 1
        %s247 = scalar_select %p246, %s24, 1
        %p248 = scmp.lt.s32.totalorder %s23, 0
        %s249 = scalar_select %p248, %s23, 0
        %s250 = sadd.s32 %s249, %s247
        %s251 = smul.addr %s250, 2
        %s252 = scalar_lea.vmem %s1, %s251
        %p253 = pneg %p82
        %p254 = pneg %p79
        %p255 = scmp.lt.s32.totalorder %s23, 0
        %s256 = scalar_select %p255, %s23, 0
        %s257 = smul.addr %s256, 2
        %s258 = scalar_lea.vmem %s2, %s257
        %p259 = pneg %p108
        %p260 = pneg %p105
        %p261 = pneg %p129
        %p262 = pneg %p126
        %p263 = pneg %p150
        %p264 = pneg %p147
        %p265 = pneg %p178
        %p266 = pneg %p175
        %s267 = sand.u32 %s165, 1
        %s268 = scalar_lea.sflag [#allocation3], %s267
        %s269 = sand.u32 %s165, 1
        %s270 = smul.addr %s269, 2
        %s271 = scalar_lea.vmem [#allocation2], %s270
        %p272 = scmp.lt.s32.totalorder %s24, 1
        %s273 = scalar_select %p272, %s24, 1
        %p274 = scmp.lt.s32.totalorder %s23, 0
        %s275 = scalar_select %p274, %s23, 0
        %s276 = sadd.s32 %s275, %s273
        %s277 = smul.addr %s276, 2
        %s278 = scalar_lea.vmem %s0, %s277
        %p279 = scmp.lt.s32.totalorder %s24, 1
        %s280 = scalar_select %p279, %s24, 1
        %p281 = scmp.lt.s32.totalorder %s23, 0
        %s282 = scalar_select %p281, %s23, 0
        %s283 = sadd.s32 %s282, %s280
        %s284 = smul.addr %s283, 2
        %s285 = scalar_lea.vmem %s1, %s284
        %p286 = scmp.lt.s32.totalorder %s23, 0
        %s287 = scalar_select %p286, %s23, 0
        %s288 = smul.addr %s287, 2
        %s289 = scalar_lea.vmem %s2, %s288
        %v290 = vlaneseq
        %v291 = vand.u32 %v290, 127
        %v292 = vld [vmem:[%s278] sm:$0x3]
        %v293 = vld [vmem:[%s3] sm:$0xff]
        %v294 = vld [vmem:[%s3 + $0x8] sm:$0xff]
        %v295 = vld [vmem:[%s3 + $0x10] sm:$0xff]
        %v296 = vld [vmem:[%s3 + $0x18] sm:$0xff]
        %v297 = vld [vmem:[%s3 + $0x20] sm:$0xff]
        %v298 = vld [vmem:[%s3 + $0x28] sm:$0xff]
        %v299 = vld [vmem:[%s285] sm:$0x3]
        %300 = vset.pattern.permute.xlu0 0
        %301 = vperm.xlu0 %300, %v299
        %v302 = vpop.permute.xlu0 %301
        %vm303 = vcmp.eq.s32.totalorder %v291, %v302
        %v304 = vsel %vm303, 1, 0
        %v305 = vcvt.s32.f32 %v304
        %306 = vset.pattern.permute.xlu0 1
        %307 = vperm.xlu0 %306, %v299
        %v308 = vpop.permute.xlu0 %307
        %vm309 = vcmp.eq.s32.totalorder %v291, %v308
        %v310 = vsel %vm309, 1, 0
        %v311 = vcvt.s32.f32 %v310
        %v312 = vadd.f32 %v305, %v311
        %313 = vset.pattern.permute.xlu0 2
        %314 = vperm.xlu0 %313, %v299
        %v315 = vpop.permute.xlu0 %314
        %vm316 = vcmp.eq.s32.totalorder %v291, %v315
        %v317 = vsel %vm316, 1, 0
        %v318 = vcvt.s32.f32 %v317
        %v319 = vadd.f32 %v312, %v318
        %320 = vset.pattern.permute.xlu0 3
        %321 = vperm.xlu0 %320, %v299
        %v322 = vpop.permute.xlu0 %321
        %vm323 = vcmp.eq.s32.totalorder %v291, %v322
        %v324 = vsel %vm323, 1, 0
        %v325 = vcvt.s32.f32 %v324
        %v326 = vadd.f32 %v319, %v325
        %v327 = vld [vmem:[%s4] sm:$0xff]
        %v328 = vld [vmem:[%s4 + $0x8] sm:$0xff]
        %v329 = vld [vmem:[%s4 + $0x10] sm:$0xff]
        %v330 = vld [vmem:[%s4 + $0x18] sm:$0xff]
        %v331 = vld [vmem:[%s4 + $0x20] sm:$0xff]
        %v332 = vld [vmem:[%s4 + $0x28] sm:$0xff]
        %v333 = vld [vmem:[%s4 + $0x30] sm:$0xff]
        %v334 = vld [vmem:[%s4 + $0x38] sm:$0xff]
        %v335 = vld [vmem:[%s4 + $0x40] sm:$0xff]
        %v336 = vld [vmem:[%s4 + $0x48] sm:$0xf]
        %vm337 = vcmask 621568
        %v339 = vsel %vm337, %v326, 0
        %vm341 = vcmask 1043456
        %v343 = vsel %vm341, %v336, 0
        %345 = vmatprep.subr.mxu0 0.0
        %346 = vmatpush1.msra.mxu0 %v327
        %347 = vmatprep.subr.mxu0 0.0
        %348 = vmatpush1.msra.mxu0 %v328
        %349 = vmatprep.subr.mxu0 0.0
        %350 = vmatpush1.msra.mxu0 %v329
        %351 = vmatprep.subr.mxu0 0.0
        %352 = vmatpush1.msra.mxu0 %v330
        %353 = vmatprep.subr.mxu0 0.0
        %354 = vmatpush1.msra.mxu0 %v331
        %355 = vmatprep.subr.mxu0 0.0
        %356 = vmatpush1.msra.mxu0 %v332
        %357 = vmatprep.subr.mxu0 0.0
        %358 = vmatpush1.msra.mxu0 %v333
        %359 = vmatprep.subr.mxu0 0.0
        %360 = vmatpush1.msra.mxu0 %v334
        %361 = vmatprep.subr.mxu0 0.0
        %362 = vmatpush1.msra.mxu0 %v335
        %363 = vmatprep.subr.mxu0 0.0
        %364 = vmatpush1.msra.mxu0 %v343
        %365 = vmatprep.subr.mxu0 0.0
        %366 = vmatpush1.msra.mxu0 0.0
        %367 = vmatprep.subr.mxu0 0.0
        %368 = vmatpush1.msra.mxu0 0.0
        %369 = vmatprep.subr.mxu0 0.0
        %370 = vmatpush1.msra.mxu0 0.0
        %371 = vmatprep.subr.mxu0 0.0
        %372 = vmatpush1.msra.mxu0 0.0
        %373 = vmatprep.subr.mxu0 0.0
        %374 = vmatpush1.msra.mxu0 0.0
        %375 = vmatprep.subr.mxu0 0.0
        %376 = vmatpush1.msra.mxu0 0.0
        %377 = vmatprep.subr.mxu0 0.0
        %378 = vmatpush1.msra.mxu0 0.0
        %379 = vmatprep.subr.mxu0 0.0
        %380 = vmatpush1.msra.mxu0 0.0
        %381 = vmatprep.subr.mxu0 0.0
        %382 = vmatpush1.msra.mxu0 0.0
        %383 = vmatprep.subr.mxu0 0.0
        %384 = vmatpush1.msra.mxu0 0.0
        %385 = vmatprep.subr.mxu0 0.0
        %386 = vmatpush1.msra.mxu0 0.0
        %387 = vmatprep.subr.mxu0 0.0
        %388 = vmatpush1.msra.mxu0 0.0
        %389 = vmatprep.subr.mxu0 0.0
        %390 = vmatpush1.msra.mxu0 0.0
        %391 = vmatprep.subr.mxu0 0.0
        %392 = vmatpush1.msra.mxu0 0.0
        %393 = vmatprep.subr.mxu0 0.0
        %394 = vmatpush1.msra.mxu0 0.0
        %395 = vmatprep.subr.mxu0 0.0
        %396 = vmatpush1.msra.mxu0 0.0
        %397 = vmatprep.subr.mxu0 0.0
        %398 = vmatpush1.msra.mxu0 0.0
        %399 = vmatprep.subr.mxu0 0.0
        %400 = vmatpush1.msra.mxu0 0.0
        %401 = vmatprep.subr.mxu0 0.0
        %402 = vmatpush1.msra.mxu0 0.0
        %403 = vmatprep.subr.mxu0 0.0
        %404 = vmatpush1.msra.mxu0 0.0
        %405 = vmatprep.subr.mxu0 0.0
        %406 = vmatpush1.msra.mxu0 0.0
        %407 = vmatprep.subr.mxu0 0.0
        %408 = vmatpush1.msra.mxu0 0.0
        %409 = vmatprep.mubr.f32.mxu0 0.0
        %410 = vmatmul.mubr.f32.gmra.mrb[0].mxu0 %v339
        %v411 = vpop.f32.mrb[0].mxu0
        %v412 = vadd.f32 0.0, %v411
        %v413 = vpop.f32.mrb[0].mxu0
        %414 = vdwg.mxu0
        %vm415 = vcmask 392192
        %v417 = vsel %vm415, %v292, 0
        %419 = vmatprep.subr.mxu0 0.0
        %420 = vmatpush1.msra.mxu0 %v293
        %421 = vmatprep.subr.mxu0 0.0
        %422 = vmatpush1.msra.mxu0 %v294
        %423 = vmatprep.subr.mxu0 0.0
        %424 = vmatpush1.msra.mxu0 %v295
        %425 = vmatprep.subr.mxu0 0.0
        %426 = vmatpush1.msra.mxu0 %v296
        %427 = vmatprep.subr.mxu0 0.0
        %428 = vmatpush1.msra.mxu0 %v297
        %429 = vmatprep.subr.mxu0 0.0
        %430 = vmatpush1.msra.mxu0 %v298
        %431 = vmatprep.subr.mxu0 0.0
        %432 = vmatpush1.msra.mxu0 0.0
        %433 = vmatprep.subr.mxu0 0.0
        %434 = vmatpush1.msra.mxu0 0.0
        %435 = vmatprep.subr.mxu0 0.0
        %436 = vmatpush1.msra.mxu0 0.0
        %437 = vmatprep.subr.mxu0 0.0
        %438 = vmatpush1.msra.mxu0 0.0
        %439 = vmatprep.subr.mxu0 0.0
        %440 = vmatpush1.msra.mxu0 0.0
        %441 = vmatprep.subr.mxu0 0.0
        %442 = vmatpush1.msra.mxu0 0.0
        %443 = vmatprep.subr.mxu0 0.0
        %444 = vmatpush1.msra.mxu0 0.0
        %445 = vmatprep.subr.mxu0 0.0
        %446 = vmatpush1.msra.mxu0 0.0
        %447 = vmatprep.subr.mxu0 0.0
        %448 = vmatpush1.msra.mxu0 0.0
        %449 = vmatprep.subr.mxu0 0.0
        %450 = vmatpush1.msra.mxu0 0.0
        %451 = vmatprep.subr.mxu0 0.0
        %452 = vmatpush1.msra.mxu0 0.0
        %453 = vmatprep.subr.mxu0 0.0
        %454 = vmatpush1.msra.mxu0 0.0
        %455 = vmatprep.subr.mxu0 0.0
        %456 = vmatpush1.msra.mxu0 0.0
        %457 = vmatprep.subr.mxu0 0.0
        %458 = vmatpush1.msra.mxu0 0.0
        %459 = vmatprep.subr.mxu0 0.0
        %460 = vmatpush1.msra.mxu0 0.0
        %461 = vmatprep.subr.mxu0 0.0
        %462 = vmatpush1.msra.mxu0 0.0
        %463 = vmatprep.subr.mxu0 0.0
        %464 = vmatpush1.msra.mxu0 0.0
        %465 = vmatprep.subr.mxu0 0.0
        %466 = vmatpush1.msra.mxu0 0.0
        %467 = vmatprep.subr.mxu0 0.0
        %468 = vmatpush1.msra.mxu0 0.0
        %469 = vmatprep.subr.mxu0 0.0
        %470 = vmatpush1.msra.mxu0 0.0
        %471 = vmatprep.subr.mxu0 0.0
        %472 = vmatpush1.msra.mxu0 0.0
        %473 = vmatprep.subr.mxu0 0.0
        %474 = vmatpush1.msra.mxu0 0.0
        %475 = vmatprep.subr.mxu0 0.0
        %476 = vmatpush1.msra.mxu0 0.0
        %477 = vmatprep.subr.mxu0 0.0
        %478 = vmatpush1.msra.mxu0 0.0
        %479 = vmatprep.subr.mxu0 0.0
        %480 = vmatpush1.msra.mxu0 0.0
        %481 = vmatprep.subr.mxu0 0.0
        %482 = vmatpush1.msra.mxu0 0.0
        %483 = vmatprep.mubr.f32.mxu0 0.0
        %484 = vmatmul.mubr.f32.gmra.mrb[0].mxu0 %v417
        %v485 = vpop.f32.mrb[0].mxu0
        %v486 = vadd.f32 %v412, %v485
        %v487 = vpop.f32.mrb[0].mxu0
        %488 = vdwg.mxu0
        %489 = vset.pattern.permute.xlu0 4
        %490 = vperm.xlu0 %489, %v299
        %v491 = vpop.permute.xlu0 %490
        %vm492 = vcmp.eq.s32.totalorder %v291, %v491
        %v493 = vsel %vm492, 1, 0
        %v494 = vcvt.s32.f32 %v493
        %495 = vset.pattern.permute.xlu0 5
        %496 = vperm.xlu0 %495, %v299
        %v497 = vpop.permute.xlu0 %496
        %vm498 = vcmp.eq.s32.totalorder %v291, %v497
        %v499 = vsel %vm498, 1, 0
        %v500 = vcvt.s32.f32 %v499
        %v501 = vadd.f32 %v494, %v500
        %502 = vset.pattern.permute.xlu0 6
        %503 = vperm.xlu0 %502, %v299
        %v504 = vpop.permute.xlu0 %503
        %vm505 = vcmp.eq.s32.totalorder %v291, %v504
        %v506 = vsel %vm505, 1, 0
        %v507 = vcvt.s32.f32 %v506
        %v508 = vadd.f32 %v501, %v507
        %509 = vset.pattern.permute.xlu0 7
        %510 = vperm.xlu0 %509, %v299
        %v511 = vpop.permute.xlu0 %510
        %vm512 = vcmp.eq.s32.totalorder %v291, %v511
        %v513 = vsel %vm512, 1, 0
        %v514 = vcvt.s32.f32 %v513
        %v515 = vadd.f32 %v508, %v514
        %s516 = scalar_lea.vmem %s4, 80
        %v517 = vld [vmem:[%s516] sm:$0xff]
        %v518 = vld [vmem:[%s516 + $0x8] sm:$0xff]
        %v519 = vld [vmem:[%s516 + $0x10] sm:$0xff]
        %v520 = vld [vmem:[%s516 + $0x18] sm:$0xff]
        %v521 = vld [vmem:[%s516 + $0x20] sm:$0xff]
        %v522 = vld [vmem:[%s516 + $0x28] sm:$0xff]
        %v523 = vld [vmem:[%s516 + $0x30] sm:$0xff]
        %v524 = vld [vmem:[%s516 + $0x38] sm:$0xff]
        %v525 = vld [vmem:[%s516 + $0x40] sm:$0xff]
        %v526 = vld [vmem:[%s516 + $0x48] sm:$0xf]
        %v528 = vsel %vm337, %v515, 0
        %v531 = vsel %vm341, %v526, 0
        %533 = vmatprep.subr.mxu0 0.0
        %534 = vmatpush1.msra.mxu0 %v517
        %535 = vmatprep.subr.mxu0 0.0
        %536 = vmatpush1.msra.mxu0 %v518
        %537 = vmatprep.subr.mxu0 0.0
        %538 = vmatpush1.msra.mxu0 %v519
        %539 = vmatprep.subr.mxu0 0.0
        %540 = vmatpush1.msra.mxu0 %v520
        %541 = vmatprep.subr.mxu0 0.0
        %542 = vmatpush1.msra.mxu0 %v521
        %543 = vmatprep.subr.mxu0 0.0
        %544 = vmatpush1.msra.mxu0 %v522
        %545 = vmatprep.subr.mxu0 0.0
        %546 = vmatpush1.msra.mxu0 %v523
        %547 = vmatprep.subr.mxu0 0.0
        %548 = vmatpush1.msra.mxu0 %v524
        %549 = vmatprep.subr.mxu0 0.0
        %550 = vmatpush1.msra.mxu0 %v525
        %551 = vmatprep.subr.mxu0 0.0
        %552 = vmatpush1.msra.mxu0 %v531
        %553 = vmatprep.subr.mxu0 0.0
        %554 = vmatpush1.msra.mxu0 0.0
        %555 = vmatprep.subr.mxu0 0.0
        %556 = vmatpush1.msra.mxu0 0.0
        %557 = vmatprep.subr.mxu0 0.0
        %558 = vmatpush1.msra.mxu0 0.0
        %559 = vmatprep.subr.mxu0 0.0
        %560 = vmatpush1.msra.mxu0 0.0
        %561 = vmatprep.subr.mxu0 0.0
        %562 = vmatpush1.msra.mxu0 0.0
        %563 = vmatprep.subr.mxu0 0.0
        %564 = vmatpush1.msra.mxu0 0.0
        %565 = vmatprep.subr.mxu0 0.0
        %566 = vmatpush1.msra.mxu0 0.0
        %567 = vmatprep.subr.mxu0 0.0
        %568 = vmatpush1.msra.mxu0 0.0
        %569 = vmatprep.subr.mxu0 0.0
        %570 = vmatpush1.msra.mxu0 0.0
        %571 = vmatprep.subr.mxu0 0.0
        %572 = vmatpush1.msra.mxu0 0.0
        %573 = vmatprep.subr.mxu0 0.0
        %574 = vmatpush1.msra.mxu0 0.0
        %575 = vmatprep.subr.mxu0 0.0
        %576 = vmatpush1.msra.mxu0 0.0
        %577 = vmatprep.subr.mxu0 0.0
        %578 = vmatpush1.msra.mxu0 0.0
        %579 = vmatprep.subr.mxu0 0.0
        %580 = vmatpush1.msra.mxu0 0.0
        %581 = vmatprep.subr.mxu0 0.0
        %582 = vmatpush1.msra.mxu0 0.0
        %583 = vmatprep.subr.mxu0 0.0
        %584 = vmatpush1.msra.mxu0 0.0
        %585 = vmatprep.subr.mxu0 0.0
        %586 = vmatpush1.msra.mxu0 0.0
        %587 = vmatprep.subr.mxu0 0.0
        %588 = vmatpush1.msra.mxu0 0.0
        %589 = vmatprep.subr.mxu0 0.0
        %590 = vmatpush1.msra.mxu0 0.0
        %591 = vmatprep.subr.mxu0 0.0
        %592 = vmatpush1.msra.mxu0 0.0
        %593 = vmatprep.subr.mxu0 0.0
        %594 = vmatpush1.msra.mxu0 0.0
        %595 = vmatprep.subr.mxu0 0.0
        %596 = vmatpush1.msra.mxu0 0.0
        %597 = vmatprep.mubr.f32.mxu0 0.0
        %598 = vmatmul.mubr.f32.gmra.mrb[0].mxu0 %v528
        %v599 = vpop.f32.mrb[0].mxu0
        %v600 = vadd.f32 0.0, %v599
        %v601 = vpop.f32.mrb[0].mxu0
        %602 = vdwg.mxu0
        %v603 = vadd.f32 %v486, %v600
        %604 = vset.pattern.permute.xlu0 8
        %605 = vperm.xlu0 %604, %v299
        %v606 = vpop.permute.xlu0 %605
        %vm607 = vcmp.eq.s32.totalorder %v291, %v606
        %v608 = vsel %vm607, 1, 0
        %v609 = vcvt.s32.f32 %v608
        %610 = vset.pattern.permute.xlu0 9
        %611 = vperm.xlu0 %610, %v299
        %v612 = vpop.permute.xlu0 %611
        %vm613 = vcmp.eq.s32.totalorder %v291, %v612
        %v614 = vsel %vm613, 1, 0
        %v615 = vcvt.s32.f32 %v614
        %v616 = vadd.f32 %v609, %v615
        %617 = vset.pattern.permute.xlu0 10
        %618 = vperm.xlu0 %617, %v299
        %v619 = vpop.permute.xlu0 %618
        %vm620 = vcmp.eq.s32.totalorder %v291, %v619
        %v621 = vsel %vm620, 1, 0
        %v622 = vcvt.s32.f32 %v621
        %v623 = vadd.f32 %v616, %v622
        %624 = vset.pattern.permute.xlu0 11
        %625 = vperm.xlu0 %624, %v299
        %v626 = vpop.permute.xlu0 %625
        %vm627 = vcmp.eq.s32.totalorder %v291, %v626
        %v628 = vsel %vm627, 1, 0
        %v629 = vcvt.s32.f32 %v628
        %v630 = vadd.f32 %v623, %v629
        %s631 = scalar_lea.vmem %s4, 160
        %v632 = vld [vmem:[%s631] sm:$0xff]
        %v633 = vld [vmem:[%s631 + $0x8] sm:$0xff]
        %v634 = vld [vmem:[%s631 + $0x10] sm:$0xff]
        %v635 = vld [vmem:[%s631 + $0x18] sm:$0xff]
        %v636 = vld [vmem:[%s631 + $0x20] sm:$0xff]
        %v637 = vld [vmem:[%s631 + $0x28] sm:$0xff]
        %v638 = vld [vmem:[%s631 + $0x30] sm:$0xff]
        %v639 = vld [vmem:[%s631 + $0x38] sm:$0xff]
        %v640 = vld [vmem:[%s631 + $0x40] sm:$0xff]
        %v641 = vld [vmem:[%s631 + $0x48] sm:$0xf]
        %v643 = vsel %vm337, %v630, 0
        %v646 = vsel %vm341, %v641, 0
        %648 = vmatprep.subr.mxu0 0.0
        %649 = vmatpush1.msra.mxu0 %v632
        %650 = vmatprep.subr.mxu0 0.0
        %651 = vmatpush1.msra.mxu0 %v633
        %652 = vmatprep.subr.mxu0 0.0
        %653 = vmatpush1.msra.mxu0 %v634
        %654 = vmatprep.subr.mxu0 0.0
        %655 = vmatpush1.msra.mxu0 %v635
        %656 = vmatprep.subr.mxu0 0.0
        %657 = vmatpush1.msra.mxu0 %v636
        %658 = vmatprep.subr.mxu0 0.0
        %659 = vmatpush1.msra.mxu0 %v637
        %660 = vmatprep.subr.mxu0 0.0
        %661 = vmatpush1.msra.mxu0 %v638
        %662 = vmatprep.subr.mxu0 0.0
        %663 = vmatpush1.msra.mxu0 %v639
        %664 = vmatprep.subr.mxu0 0.0
        %665 = vmatpush1.msra.mxu0 %v640
        %666 = vmatprep.subr.mxu0 0.0
        %667 = vmatpush1.msra.mxu0 %v646
        %668 = vmatprep.subr.mxu0 0.0
        %669 = vmatpush1.msra.mxu0 0.0
        %670 = vmatprep.subr.mxu0 0.0
        %671 = vmatpush1.msra.mxu0 0.0
        %672 = vmatprep.subr.mxu0 0.0
        %673 = vmatpush1.msra.mxu0 0.0
        %674 = vmatprep.subr.mxu0 0.0
        %675 = vmatpush1.msra.mxu0 0.0
        %676 = vmatprep.subr.mxu0 0.0
        %677 = vmatpush1.msra.mxu0 0.0
        %678 = vmatprep.subr.mxu0 0.0
        %679 = vmatpush1.msra.mxu0 0.0
        %680 = vmatprep.subr.mxu0 0.0
        %681 = vmatpush1.msra.mxu0 0.0
        %682 = vmatprep.subr.mxu0 0.0
        %683 = vmatpush1.msra.mxu0 0.0
        %684 = vmatprep.subr.mxu0 0.0
        %685 = vmatpush1.msra.mxu0 0.0
        %686 = vmatprep.subr.mxu0 0.0
        %687 = vmatpush1.msra.mxu0 0.0
        %688 = vmatprep.subr.mxu0 0.0
        %689 = vmatpush1.msra.mxu0 0.0
        %690 = vmatprep.subr.mxu0 0.0
        %691 = vmatpush1.msra.mxu0 0.0
        %692 = vmatprep.subr.mxu0 0.0
        %693 = vmatpush1.msra.mxu0 0.0
        %694 = vmatprep.subr.mxu0 0.0
        %695 = vmatpush1.msra.mxu0 0.0
        %696 = vmatprep.subr.mxu0 0.0
        %697 = vmatpush1.msra.mxu0 0.0
        %698 = vmatprep.subr.mxu0 0.0
        %699 = vmatpush1.msra.mxu0 0.0
        %700 = vmatprep.subr.mxu0 0.0
        %701 = vmatpush1.msra.mxu0 0.0
        %702 = vmatprep.subr.mxu0 0.0
        %703 = vmatpush1.msra.mxu0 0.0
        %704 = vmatprep.subr.mxu0 0.0
        %705 = vmatpush1.msra.mxu0 0.0
        %706 = vmatprep.subr.mxu0 0.0
        %707 = vmatpush1.msra.mxu0 0.0
        %708 = vmatprep.subr.mxu0 0.0
        %709 = vmatpush1.msra.mxu0 0.0
        %710 = vmatprep.subr.mxu0 0.0
        %711 = vmatpush1.msra.mxu0 0.0
        %712 = vmatprep.mubr.f32.mxu0 0.0
        %713 = vmatmul.mubr.f32.gmra.mrb[0].mxu0 %v643
        %v714 = vpop.f32.mrb[0].mxu0
        %v715 = vadd.f32 0.0, %v714
        %v716 = vpop.f32.mrb[0].mxu0
        %717 = vdwg.mxu0
        %v718 = vadd.f32 %v603, %v715
        %719 = vset.pattern.permute.xlu0 12
        %720 = vperm.xlu0 %719, %v299
        %v721 = vpop.permute.xlu0 %720
        %vm722 = vcmp.eq.s32.totalorder %v291, %v721
        %v723 = vsel %vm722, 1, 0
        %v724 = vcvt.s32.f32 %v723
        %725 = vset.pattern.permute.xlu0 13
        %726 = vperm.xlu0 %725, %v299
        %v727 = vpop.permute.xlu0 %726
        %vm728 = vcmp.eq.s32.totalorder %v291, %v727
        %v729 = vsel %vm728, 1, 0
        %v730 = vcvt.s32.f32 %v729
        %v731 = vadd.f32 %v724, %v730
        %732 = vset.pattern.permute.xlu0 14
        %733 = vperm.xlu0 %732, %v299
        %v734 = vpop.permute.xlu0 %733
        %vm735 = vcmp.eq.s32.totalorder %v291, %v734
        %v736 = vsel %vm735, 1, 0
        %v737 = vcvt.s32.f32 %v736
        %v738 = vadd.f32 %v731, %v737
        %739 = vset.pattern.permute.xlu0 15
        %740 = vperm.xlu0 %739, %v299
        %v741 = vpop.permute.xlu0 %740
        %vm742 = vcmp.eq.s32.totalorder %v291, %v741
        %v743 = vsel %vm742, 1, 0
        %v744 = vcvt.s32.f32 %v743
        %v745 = vadd.f32 %v738, %v744
        %s746 = scalar_lea.vmem %s4, 240
        %v747 = vld [vmem:[%s746] sm:$0xff]
        %v748 = vld [vmem:[%s746 + $0x8] sm:$0xff]
        %v749 = vld [vmem:[%s746 + $0x10] sm:$0xff]
        %v750 = vld [vmem:[%s746 + $0x18] sm:$0xff]
        %v751 = vld [vmem:[%s746 + $0x20] sm:$0xff]
        %v752 = vld [vmem:[%s746 + $0x28] sm:$0xff]
        %v753 = vld [vmem:[%s746 + $0x30] sm:$0xff]
        %v754 = vld [vmem:[%s746 + $0x38] sm:$0xff]
        %v755 = vld [vmem:[%s746 + $0x40] sm:$0xff]
        %v756 = vld [vmem:[%s746 + $0x48] sm:$0xf]
        %v758 = vsel %vm337, %v745, 0
        %v761 = vsel %vm341, %v756, 0
        %763 = vmatprep.subr.mxu0 0.0
        %764 = vmatpush1.msra.mxu0 %v747
        %765 = vmatprep.subr.mxu0 0.0
        %766 = vmatpush1.msra.mxu0 %v748
        %767 = vmatprep.subr.mxu0 0.0
        %768 = vmatpush1.msra.mxu0 %v749
        %769 = vmatprep.subr.mxu0 0.0
        %770 = vmatpush1.msra.mxu0 %v750
        %771 = vmatprep.subr.mxu0 0.0
        %772 = vmatpush1.msra.mxu0 %v751
        %773 = vmatprep.subr.mxu0 0.0
        %774 = vmatpush1.msra.mxu0 %v752
        %775 = vmatprep.subr.mxu0 0.0
        %776 = vmatpush1.msra.mxu0 %v753
        %777 = vmatprep.subr.mxu0 0.0
        %778 = vmatpush1.msra.mxu0 %v754
        %779 = vmatprep.subr.mxu0 0.0
        %780 = vmatpush1.msra.mxu0 %v755
        %781 = vmatprep.subr.mxu0 0.0
        %782 = vmatpush1.msra.mxu0 %v761
        %783 = vmatprep.subr.mxu0 0.0
        %784 = vmatpush1.msra.mxu0 0.0
        %785 = vmatprep.subr.mxu0 0.0
        %786 = vmatpush1.msra.mxu0 0.0
        %787 = vmatprep.subr.mxu0 0.0
        %788 = vmatpush1.msra.mxu0 0.0
        %789 = vmatprep.subr.mxu0 0.0
        %790 = vmatpush1.msra.mxu0 0.0
        %791 = vmatprep.subr.mxu0 0.0
        %792 = vmatpush1.msra.mxu0 0.0
        %793 = vmatprep.subr.mxu0 0.0
        %794 = vmatpush1.msra.mxu0 0.0
        %795 = vmatprep.subr.mxu0 0.0
        %796 = vmatpush1.msra.mxu0 0.0
        %797 = vmatprep.subr.mxu0 0.0
        %798 = vmatpush1.msra.mxu0 0.0
        %799 = vmatprep.subr.mxu0 0.0
        %800 = vmatpush1.msra.mxu0 0.0
        %801 = vmatprep.subr.mxu0 0.0
        %802 = vmatpush1.msra.mxu0 0.0
        %803 = vmatprep.subr.mxu0 0.0
        %804 = vmatpush1.msra.mxu0 0.0
        %805 = vmatprep.subr.mxu0 0.0
        %806 = vmatpush1.msra.mxu0 0.0
        %807 = vmatprep.subr.mxu0 0.0
        %808 = vmatpush1.msra.mxu0 0.0
        %809 = vmatprep.subr.mxu0 0.0
        %810 = vmatpush1.msra.mxu0 0.0
        %811 = vmatprep.subr.mxu0 0.0
        %812 = vmatpush1.msra.mxu0 0.0
        %813 = vmatprep.subr.mxu0 0.0
        %814 = vmatpush1.msra.mxu0 0.0
        %815 = vmatprep.subr.mxu0 0.0
        %816 = vmatpush1.msra.mxu0 0.0
        %817 = vmatprep.subr.mxu0 0.0
        %818 = vmatpush1.msra.mxu0 0.0
        %819 = vmatprep.subr.mxu0 0.0
        %820 = vmatpush1.msra.mxu0 0.0
        %821 = vmatprep.subr.mxu0 0.0
        %822 = vmatpush1.msra.mxu0 0.0
        %823 = vmatprep.subr.mxu0 0.0
        %824 = vmatpush1.msra.mxu0 0.0
        %825 = vmatprep.subr.mxu0 0.0
        %826 = vmatpush1.msra.mxu0 0.0
        %827 = vmatprep.mubr.f32.mxu0 0.0
        %828 = vmatmul.mubr.f32.gmra.mrb[0].mxu0 %v758
        %v829 = vpop.f32.mrb[0].mxu0
        %v830 = vadd.f32 0.0, %v829
        %v831 = vpop.f32.mrb[0].mxu0
        %832 = vdwg.mxu0
        %v833 = vadd.f32 %v718, %v830
        %v834 = vld [vmem:[%s289] sm:$0x3]
        %v835 = vadd.f32 %v833, %v834
        %836 = vst [vmem:[%s271] sm:$0x3] %v835
        %s837 = sand.u32 %s165, 1
        %s838 = scalar_lea.sflag [#allocation3], %s837
        %s839 = sand.u32 %s165, 1
        %s840 = smul.addr %s839, 2
        %s841 = scalar_lea.vmem [#allocation2], %s840
        // Predicated region
        $region41: #{tpu_custom_call.1} parent=39 // pred_check
          %p842 = pneg %p175
        $region42: #{tpu_custom_call.1} parent=39 // pred_check_branch
          %844 = sbr.rel (%p842) target = $region44
        $region43: #{tpu_custom_call.1} parent=39 // pred_region
          %s846 = ssub.s32 32, 32
          %847 = vsyncadd %s838, %s846
          %s848 = sadd.s32 %s23, %s24
          %s849 = smul.addr %s848, 32
          %s850 = scalar_lea.hbm %s5, %s849
          %s852 = sshll.u32 %s841, 4
          %s853 = int_to_ptr.vmem [resolvable:$true] %s852
          %855 = dma.vmem_to_hbm [thread:$0]  %s853, 32, %s850, %s838
        $region44: #{tpu_custom_call.1} parent=39 // pred_fallthru
          _
      $region40: #{tpu_custom_call.1} parent=5 // pred_fallthru
        _
      %p856 = scmp.le.s32.totalorder 2, %s14
      // Predicated region
      $region45: #{tpu_custom_call.1} parent=5 // pred_check
        %p857 = pneg %p856
      $region46: #{tpu_custom_call.1} parent=5 // pred_check_branch
        %859 = sbr.rel (%p857) target = $region48
      $region47: #{tpu_custom_call.1} parent=5 // pred_region
        %s860 = ssub.s32 %s14, 2
        // Predicated region
        $region49: #{tpu_custom_call.1} parent=47 // pred_check
          %p861 = pneg %p181
        $region50: #{tpu_custom_call.1} parent=47 // pred_check_branch
          %863 = sbr.rel (%p861) target = $region52
        $region51: #{tpu_custom_call.1} parent=47 // pred_region
          %s864 = sand.u32 %s166, 1
          %s865 = scalar_lea.sflag [#allocation3], %s864
          %s866 = sand.u32 %s166, 1
          %s867 = smul.addr %s866, 2
          %s868 = scalar_lea.vmem [#allocation2], %s867
          %869 = dma.done %s865, 32
        $region52: #{tpu_custom_call.1} parent=47 // pred_fallthru
          _
      $region48: #{tpu_custom_call.1} parent=5 // pred_fallthru
        _
    $region6: #{tpu_custom_call.1} parent=1 // loop_footer
      %s18 = sadd.s32 1, %s14
    $region7: #{tpu_custom_call.1} parent=1 // loop_footer_branch
      %13 = sbr.rel target = $region3
    $region8: #{tpu_custom_call.1} parent=1 // loop_exit
      _
    %870 = vsyncpa [#allocation3], 1
    %s871 = scalar_lea.sflag [#allocation3], 1
    %872 = vsyncpa %s871, 1

</llo_original>
